<compile_context>
chip_gen: v7x
topology: tpu7x:2x2x1
jax: 0.10.0
libtpu: 0.0.40
codegen_flags: <defaults>
</compile_context>

<pallas_src>
import functools

import jax
import jax.numpy as jnp
from jax import lax
from jax.experimental import pallas as pl
from jax.experimental.pallas import tpu as pltpu


def _cdilated_kernel(x_ref, w_ref, o_ref):
    # x_ref: (1, K*K*Cin, M_pad)  im2col columns of one batch element
    # w_ref: (Cout, K*K*Cin)      packed weight
    # o_ref: (1, Cout, M_pad)     lane-dense flattened output
    out = lax.dot_general(
        w_ref[...], x_ref[0],
        (((1,), (0,)), ((), ())),          # contract K*K*Cin
        preferred_element_type=jnp.float32)
    o_ref[0] = out.astype(o_ref.dtype)


def _im2col(x_nchw, ksize, dilation, stride, pad):
    """(B, Cin, H, W) -> (B, K*K*Cin, H_out*W_out), column order (kh, kw, cin)."""
    B, Cin, H, W = x_nchw.shape
    Hp, Wp = H + 2 * pad, W + 2 * pad
    H_out = (Hp - dilation * (ksize - 1) - 1) // stride + 1
    W_out = (Wp - dilation * (ksize - 1) - 1) // stride + 1
    xp = jnp.pad(x_nchw, ((0, 0), (0, 0), (pad, pad), (pad, pad)))
    taps = []
    for kh in range(ksize):
        for kw in range(ksize):
            h0, w0 = kh * dilation, kw * dilation
            t = lax.slice(
                xp,
                (0, 0, h0, w0),
                (B, Cin, h0 + stride * (H_out - 1) + 1,
                 w0 + stride * (W_out - 1) + 1),
                (1, 1, stride, stride))                    # (B, Cin, H_out, W_out)
            taps.append(t.reshape(B, Cin, H_out * W_out))
    # (B, K*K, Cin, M) -> (B, K*K*Cin, M); contraction index = (kh*K+kw)*Cin + cin
    cols = jnp.stack(taps, axis=1).reshape(B, ksize * ksize * Cin, H_out * W_out)
    return cols, H_out, W_out


def cdilated_forward(x_nchw, weight_oihw, *, stride=1, dilation=1):
    """Equivalent of CDilated.forward. x: (B, Cin, H, W), weight: (Cout, Cin, K, K)."""
    B, Cin, H, W = x_nchw.shape
    Cout, Cin_w, K, K2 = weight_oihw.shape
    assert Cin == Cin_w and K == K2
    pad = ((K - 1) // 2) * dilation

    # Wrapper-side im2col: contraction dim on sublanes, pixels on lanes.
    cols, H_out, W_out = _im2col(x_nchw, K, dilation, stride, pad)
    M = H_out * W_out
    M_pad = ((M + 127) // 128) * 128          # lane-dense output width
    if M_pad != M:
        cols = jnp.pad(cols, ((0, 0), (0, 0), (0, M_pad - M)))
    KKC = K * K * Cin

    # OIHW -> (Cout, K*K*Cin), column order (kh, kw, cin) matching im2col.
    w = jnp.transpose(weight_oihw, (0, 2, 3, 1)).reshape(Cout, KKC)

    out_flat = pl.pallas_call(
        _cdilated_kernel,
        out_shape=jax.ShapeDtypeStruct((B, Cout, M_pad), x_nchw.dtype),
        grid_spec=pltpu.PrefetchScalarGridSpec(
            num_scalar_prefetch=0,
            grid=(B,),                                     # one step per batch elem
            in_specs=[
                pl.BlockSpec((1, KKC, M_pad), lambda b: (b, 0, 0)),
                pl.BlockSpec((Cout, KKC), lambda b: (0, 0)),
            ],
            out_specs=pl.BlockSpec((1, Cout, M_pad), lambda b: (b, 0, 0)),
        ),
        compiler_params=pltpu.CompilerParams(
            dimension_semantics=("parallel",),             # 2 TCs on v7x split batch
            vmem_limit_bytes=32 * 1024 * 1024),
    )(cols, w)

    # Drop lane padding (if any) and restore spatial layout (row-major, free).
    out = out_flat[:, :, :M].reshape(B, Cout, H_out, W_out)
    return out
    # TODO(synk): for several parallel CDilated branches sharing one input
    # (ESPNet block), fuse them into a single pallas_call with a wider packed
    # weight so one invocation covers all branches.


def _reference(x, weight, stride, dilation, K):
    pad = ((K - 1) // 2) * dilation
    return lax.conv_general_dilated(
        x, weight,
        window_strides=(stride, stride),
        padding=((pad, pad), (pad, pad)),
        rhs_dilation=(dilation, dilation),
        dimension_numbers=("NCHW", "OIHW", "NCHW"))


if __name__ == "__main__":
    # Module hyper-params: nIn=4, nOut=8, kSize=3, stride=1, d=2.
    B, Cin, H, W = 2, 4, 16, 16
    Cout, K = 8, 3

    key = jax.random.PRNGKey(0)
    kx, kw = jax.random.split(key)
    x = jax.random.normal(kx, (B, Cin, H, W), dtype=jnp.float32)
    weight = jax.random.normal(kw, (Cout, Cin, K, K), dtype=jnp.float32) * 0.1

    # Primary config: stride=1, dilation=2.
    out = jax.block_until_ready(cdilated_forward(x, weight, stride=1, dilation=2))
    ref = _reference(x, weight, stride=1, dilation=2, K=K)
    assert out.shape == ref.shape, (out.shape, ref.shape)
    assert jnp.allclose(out, ref, atol=1e-4, rtol=1e-4)

    # Strided config (stride folded into the kernel's im2col): stride=2, d=1.
    out2 = jax.block_until_ready(cdilated_forward(x, weight, stride=2, dilation=1))
    ref2 = _reference(x, weight, stride=2, dilation=1, K=K)
    assert out2.shape == ref2.shape, (out2.shape, ref2.shape)
    assert jnp.allclose(out2, ref2, atol=1e-4, rtol=1e-4)

    print("KERNEL_OK")
</pallas_src>

<mosaic_0001>
module attributes {stable_mosaic.version = 11 : i64} {
  func.func @_cdilated_kernel(%arg0: i32, %arg1: memref<1x36x256xf32, #tpu.memory_space<vmem>>, %arg2: memref<8x36xf32, #tpu.memory_space<vmem>>, %arg3: memref<1x8x256xf32, #tpu.memory_space<vmem>>) attributes {dimension_semantics = [#tpu.dimension_semantics<parallel>], iteration_bounds = array<i64: 2>, scalar_prefetch = 0 : i64, scratch_operands = 0 : i64, tpu.core_type = #tpu.core_type<tc>, window_params = [{transform_indices = @transform_0, window_bounds = array<i64: 1, 36, 256>}, {pipeline_mode = #tpu.pipeline_mode<synchronous>, transform_indices = @transform_1, window_bounds = array<i64: 8, 36>}, {transform_indices = @transform_2, window_bounds = array<i64: 1, 8, 256>}]} {
    %c0 = arith.constant 0 : index
    %c0_0 = arith.constant 0 : index
    %0 = vector.load %arg2[%c0, %c0_0] : memref<8x36xf32, #tpu.memory_space<vmem>>, vector<8x36xf32>
    %c0_1 = arith.constant 0 : index
    %c0_2 = arith.constant 0 : index
    %c0_3 = arith.constant 0 : index
    %1 = vector.load %arg1[%c0_1, %c0_2, %c0_3] : memref<1x36x256xf32, #tpu.memory_space<vmem>>, vector<1x36x256xf32>
    %2 = vector.shape_cast %1 : vector<1x36x256xf32> to vector<36x256xf32>
    %cst = arith.constant dense<0.000000e+00> : vector<8x256xf32>
    %3 = tpu.matmul %0, %2, %cst {dimension_numbers = #tpu.dot_dimension_numbers<[1], [0], [0], [1], [0, 0, 1, 1], [], []>} : vector<8x36xf32>, vector<36x256xf32>, vector<8x256xf32> -> vector<8x256xf32>
    %c0_4 = arith.constant 0 : index
    %c0_5 = arith.constant 0 : index
    %c0_6 = arith.constant 0 : index
    %4 = vector.load %arg3[%c0_4, %c0_5, %c0_6] : memref<1x8x256xf32, #tpu.memory_space<vmem>>, vector<1x8x256xf32>
    %5 = vector.shape_cast %4 : vector<1x8x256xf32> to vector<8x256xf32>
    %6 = vector.shape_cast %3 : vector<8x256xf32> to vector<1x8x256xf32>
    tpu.vector_store %arg3[%c0_4, %c0_5, %c0_6], %6 {strides = array<i32>} : memref<1x8x256xf32, #tpu.memory_space<vmem>>, vector<1x8x256xf32>,
    return
  }
  func.func @transform_0(%arg0: i32) -> (i32, i32, i32) {
    %c0_i32 = arith.constant 0 : i32
    %c0_i32_0 = arith.constant 0 : i32
    %c0_i32_1 = arith.constant 0 : i32
    return %arg0, %c0_i32, %c0_i32_0 : i32, i32, i32
  }
  func.func @transform_1(%arg0: i32) -> (i32, i32) {
    %c0_i32 = arith.constant 0 : i32
    %c0_i32_0 = arith.constant 0 : i32
    %c0_i32_1 = arith.constant 0 : i32
    return %c0_i32, %c0_i32_0 : i32, i32
  }
  func.func @transform_2(%arg0: i32) -> (i32, i32, i32) {
    %c0_i32 = arith.constant 0 : i32
    %c0_i32_0 = arith.constant 0 : i32
    %c0_i32_1 = arith.constant 0 : i32
    return %arg0, %c0_i32, %c0_i32_0 : i32, i32, i32
  }
}

</mosaic_0001>

<llo_original>
// kernel: tpu_custom_call.1
$region0: #{tpu_custom_call.1}
  #allocation0 [shape = 'u32[]', space=smem, size = 0x4, offset = 0x4, fixed_abs, tag = 'smem constant byte address 0x4 - core index']
  #allocation1 [shape = 'u32[144,128]{1,0:T(1,128)}', space=vmem, size = 0x12000, scoped, tag = 'internal scratch']
  %s0 = inlined_call_operand.vmem [shape: f32[2,36,256], index: 0, kind: input, shape index: {}]
  %s1 = inlined_call_operand.vmem [shape: f32[8,36], index: 1, kind: input, shape index: {}]
  %s2 = inlined_call_operand.hbm [shape: f32[2,8,256], index: 2, kind: output, shape index: {}]
  %s3 = sld [smem:[#allocation0]]
  $region41: #{tpu_custom_call.1} parent=0
    _
  %s5 = ssub.s32 1, %s3
  %s6 = scalar_select 0, %s5, %s3
  $region1: #{tpu_custom_call.1} parent=0
    #allocation2 [shape = 'u8[16384]{0}', space=vmem, size = 0x4000, scoped, tag = 'output window, operand 0']
    #allocation3 [shape = 's32[2]{0}', space=sflag, size = 0x8, scoped, tag = 'scoped memory for tpu_custom_call.1']
    %7 = vsyncpa [#allocation3], 0
    %s8 = scalar_lea.sflag [#allocation3], 1
    %9 = vsyncpa %s8, 0
    loop: start=0, step=1, limit=4
    $region2: #{tpu_custom_call.1} parent=1 // loop_pre_header
      _
    $region3: #{tpu_custom_call.1} parent=1 // loop_header
      %s11 = sphi 0, %s15
      %p12 = scmp.ge.s32.totalorder %s11, 4
      %s21 = sphi 0, %s23
      %s24 = sphi 0, %s21
      %s25 = sphi 0, %s24
      %s41 = sphi 0, %s25
      %s45 = sphi 0, %s45
      %s47 = sphi 0, %s45
      %s48 = sphi 0, %s47
      %s62 = sphi 0, %s48
      %s68 = sphi 0, %s70
      %s71 = sphi 0, %s68
      %s72 = sphi 0, %s71
      %s88 = sphi 0, %s72
    $region4: #{tpu_custom_call.1} parent=1 // loop_header_branch
      %14 = sbr.rel (%p12) target = $region8
    $region5: #{tpu_custom_call.1} parent=1 // loop_body
      %s16 = ssub.s32 %s11, 1
      %s17 = ssub.s32 %s11, 2
      %s18 = sadd.s32 %s11, 1
      %s19 = ssub.s32 %s11, %s18
      %p20 = scmp.eq.s32.totalorder %s19, 0
      %s22 = sadd.s32 %s21, 1
      %s23 = scalar_select %p20, %s21, %s22
      %p26 = pneg %p20
      %p27 = scmp.eq.s32.totalorder %s11, 1
      %p28 = por %p26, %p27
      %p29 = scmp.ne.s32.totalorder %s21, %s24
      %p30 = scmp.eq.s32.totalorder %s11, 0
      %p31 = por %p29, %p30
      %p32 = scmp.ne.s32.totalorder %s21, %s24
      %p33 = scmp.eq.s32.totalorder %s16, 1
      %p34 = por %p32, %p33
      %p35 = scmp.ne.s32.totalorder %s24, %s25
      %p36 = scmp.eq.s32.totalorder %s16, 0
      %p37 = por %p35, %p36
      %p38 = scmp.ne.s32.totalorder %s24, %s25
      %p39 = scmp.eq.s32.totalorder %s17, 1
      %p40 = por %p38, %p39
      %p42 = scmp.ne.s32.totalorder %s25, %s41
      %p43 = scmp.eq.s32.totalorder %s17, 0
      %p44 = por %p42, %p43
      %s46 = sadd.s32 %s45, 1
      %p49 = scmp.eq.s32.totalorder %s11, 1
      %p50 = scmp.ne.s32.totalorder %s45, %s47
      %p51 = scmp.eq.s32.totalorder %s11, 0
      %p52 = por %p50, %p51
      %p53 = scmp.ne.s32.totalorder %s45, %s47
      %p54 = scmp.eq.s32.totalorder %s16, 1
      %p55 = por %p53, %p54
      %p56 = scmp.ne.s32.totalorder %s47, %s48
      %p57 = scmp.eq.s32.totalorder %s16, 0
      %p58 = por %p56, %p57
      %p59 = scmp.ne.s32.totalorder %s47, %s48
      %p60 = scmp.eq.s32.totalorder %s17, 1
      %p61 = por %p59, %p60
      %p63 = scmp.ne.s32.totalorder %s48, %s62
      %p64 = scmp.eq.s32.totalorder %s17, 0
      %p65 = por %p63, %p64
      %s66 = ssub.s32 %s11, %s18
      %p67 = scmp.eq.s32.totalorder %s66, 0
      %s69 = sadd.s32 %s68, 1
      %s70 = scalar_select %p67, %s68, %s69
      %p73 = pneg %p67
      %p74 = scmp.eq.s32.totalorder %s11, 1
      %p75 = por %p73, %p74
      %p76 = scmp.ne.s32.totalorder %s68, %s71
      %p77 = scmp.eq.s32.totalorder %s11, 0
      %p78 = por %p76, %p77
      %p79 = scmp.ne.s32.totalorder %s68, %s71
      %p80 = scmp.eq.s32.totalorder %s16, 1
      %p81 = por %p79, %p80
      %p82 = scmp.ne.s32.totalorder %s71, %s72
      %p83 = scmp.eq.s32.totalorder %s16, 0
      %p84 = por %p82, %p83
      %p85 = scmp.ne.s32.totalorder %s71, %s72
      %p86 = scmp.eq.s32.totalorder %s17, 1
      %p87 = por %p85, %p86
      %p89 = scmp.ne.s32.totalorder %s72, %s88
      %p90 = scmp.eq.s32.totalorder %s17, 0
      %p91 = por %p89, %p90
      %p92 = scmp.le.s32.totalorder 1, %s11
      %p93 = scmp.lt.s32.totalorder %s11, 3
      %p94 = pnand %p92, %p93
      %p95 = pneg %p94
      // Predicated region
      $region9: #{tpu_custom_call.1} parent=5 // pred_check
        _
      $region10: #{tpu_custom_call.1} parent=5 // pred_check_branch
        %97 = sbr.rel (%p94) target = $region12
      $region11: #{tpu_custom_call.1} parent=5 // pred_region
        %s98 = ssub.s32 %s11, 1
        // Predicated region
        $region13: #{tpu_custom_call.1} parent=11 // pred_check
          %p99 = pneg %p58
        $region14: #{tpu_custom_call.1} parent=11 // pred_check_branch
          %101 = sbr.rel (%p99) target = $region16
        $region15: #{tpu_custom_call.1} parent=11 // pred_region
          _
        $region16: #{tpu_custom_call.1} parent=11 // pred_fallthru
          _
      $region12: #{tpu_custom_call.1} parent=5 // pred_fallthru
        _
      %p102 = scmp.lt.s32.totalorder %s11, 2
      // Predicated region
      $region17: #{tpu_custom_call.1} parent=5 // pred_check
        %p103 = pneg %p102
      $region18: #{tpu_custom_call.1} parent=5 // pred_check_branch
        %105 = sbr.rel (%p103) target = $region20
      $region19: #{tpu_custom_call.1} parent=5 // pred_region
        // Predicated region
        $region21: #{tpu_custom_call.1} parent=19 // pred_check
          %p106 = pneg %p31
        $region22: #{tpu_custom_call.1} parent=19 // pred_check_branch
          %108 = sbr.rel (%p106) target = $region24
        $region23: #{tpu_custom_call.1} parent=19 // pred_region
          %p109 = scmp.lt.s32.totalorder %s11, 1
          %s110 = scalar_select %p109, %s11, 1
          %s111 = smul.addr %s110, 10
          %s112 = smul.addr %s111, 8
          %s113 = scalar_lea.vmem %s0, %s112
        $region24: #{tpu_custom_call.1} parent=19 // pred_fallthru
          _
      $region20: #{tpu_custom_call.1} parent=5 // pred_fallthru
        _
      %p114 = scmp.le.s32.totalorder 1, %s11
      %p115 = scmp.lt.s32.totalorder %s11, 3
      %p116 = pnand %p114, %p115
      %p117 = pneg %p116
      // Predicated region
      $region25: #{tpu_custom_call.1} parent=5 // pred_check
        _
      $region26: #{tpu_custom_call.1} parent=5 // pred_check_branch
        %119 = sbr.rel (%p116) target = $region28
      $region27: #{tpu_custom_call.1} parent=5 // pred_region
        %s120 = ssub.s32 %s11, 1
        %p121 = scmp.lt.s32.totalorder %s16, 1
        %s122 = scalar_select %p121, %s16, 1
        %s123 = smul.addr %s122, 10
        %s124 = smul.addr %s123, 8
        %s125 = scalar_lea.vmem %s0, %s124
        %p126 = pneg %p37
        %p127 = pneg %p34
        %p128 = pneg %p58
        %p129 = pneg %p55
        %p130 = pneg %p84
        %p131 = pneg %p81
        %s132 = sand.u32 %s71, 1
        %s133 = scalar_lea.sflag [#allocation3], %s132
        %s134 = sand.u32 %s71, 1
        %s135 = smul.addr %s134, 16
        %s136 = scalar_lea.vmem [#allocation2], %s135
        %p137 = scmp.lt.s32.totalorder %s16, 1
        %s138 = scalar_select %p137, %s16, 1
        %s139 = smul.addr %s138, 10
        %s140 = smul.addr %s139, 8
        %s141 = scalar_lea.vmem %s0, %s140
        %v142 = vld [vmem:[%s1] sm:$0xff]
        %v143 = vld [vmem:[%s141] sm:$0xff]
        %v144 = vld [vmem:[%s141 + $0x8] sm:$0xff]
        %v145 = vld [vmem:[%s141 + $0x10] sm:$0xff]
        %v146 = vld [vmem:[%s141 + $0x18] sm:$0xff]
        %v147 = vld [vmem:[%s141 + $0x20] sm:$0xff]
        %v148 = vld [vmem:[%s141 + $0x28] sm:$0xff]
        %v149 = vld [vmem:[%s141 + $0x30] sm:$0xff]
        %v150 = vld [vmem:[%s141 + $0x38] sm:$0xff]
        %v151 = vld [vmem:[%s141 + $0x40] sm:$0xf]
        %v152 = vld [vmem:[%s141 + $0x48] sm:$0xf]
        %vm153 = vcmask 293888
        %v155 = vsel %vm153, %v142, 0
        %vm157 = vcmask 1043456
        %v159 = vsel %vm157, %v151, 0
        %v162 = vsel %vm157, %v152, 0
        %164 = vmatprep.subr.mxu0 %v144
        %165 = vmatpush1.msra.mxu0 %v143
        %166 = vmatprep.subr.mxu0 %v146
        %167 = vmatpush1.msra.mxu0 %v145
        %168 = vmatprep.subr.mxu0 %v148
        %169 = vmatpush1.msra.mxu0 %v147
        %170 = vmatprep.subr.mxu0 %v150
        %171 = vmatpush1.msra.mxu0 %v149
        %172 = vmatprep.subr.mxu0 %v162
        %173 = vmatpush1.msra.mxu0 %v159
        %174 = vmatprep.subr.mxu0 0.0
        %175 = vmatpush1.msra.mxu0 0.0
        %176 = vmatprep.subr.mxu0 0.0
        %177 = vmatpush1.msra.mxu0 0.0
        %178 = vmatprep.subr.mxu0 0.0
        %179 = vmatpush1.msra.mxu0 0.0
        %180 = vmatprep.subr.mxu0 0.0
        %181 = vmatpush1.msra.mxu0 0.0
        %182 = vmatprep.subr.mxu0 0.0
        %183 = vmatpush1.msra.mxu0 0.0
        %184 = vmatprep.subr.mxu0 0.0
        %185 = vmatpush1.msra.mxu0 0.0
        %186 = vmatprep.subr.mxu0 0.0
        %187 = vmatpush1.msra.mxu0 0.0
        %188 = vmatprep.subr.mxu0 0.0
        %189 = vmatpush1.msra.mxu0 0.0
        %190 = vmatprep.subr.mxu0 0.0
        %191 = vmatpush1.msra.mxu0 0.0
        %192 = vmatprep.subr.mxu0 0.0
        %193 = vmatpush1.msra.mxu0 0.0
        %194 = vmatprep.subr.mxu0 0.0
        %195 = vmatpush1.msra.mxu0 0.0
        %196 = vmatprep.subr.mxu0 0.0
        %197 = vmatpush1.msra.mxu0 0.0
        %198 = vmatprep.subr.mxu0 0.0
        %199 = vmatpush1.msra.mxu0 0.0
        %200 = vmatprep.subr.mxu0 0.0
        %201 = vmatpush1.msra.mxu0 0.0
        %202 = vmatprep.subr.mxu0 0.0
        %203 = vmatpush1.msra.mxu0 0.0
        %204 = vmatprep.subr.mxu0 0.0
        %205 = vmatpush1.msra.mxu0 0.0
        %206 = vmatprep.subr.mxu0 0.0
        %207 = vmatpush1.msra.mxu0 0.0
        %208 = vmatprep.subr.mxu0 0.0
        %209 = vmatpush1.msra.mxu0 0.0
        %210 = vmatprep.subr.mxu0 0.0
        %211 = vmatpush1.msra.mxu0 0.0
        %212 = vmatprep.subr.mxu0 0.0
        %213 = vmatpush1.msra.mxu0 0.0
        %214 = vmatprep.subr.mxu0 0.0
        %215 = vmatpush1.msra.mxu0 0.0
        %216 = vmatprep.subr.mxu0 0.0
        %217 = vmatpush1.msra.mxu0 0.0
        %218 = vmatprep.subr.mxu0 0.0
        %219 = vmatpush1.msra.mxu0 0.0
        %220 = vmatprep.subr.mxu0 0.0
        %221 = vmatpush1.msra.mxu0 0.0
        %222 = vmatprep.subr.mxu0 0.0
        %223 = vmatpush1.msra.mxu0 0.0
        %224 = vmatprep.subr.mxu0 0.0
        %225 = vmatpush1.msra.mxu0 0.0
        %226 = vmatprep.subr.mxu0 0.0
        %227 = vmatpush1.msra.mxu0 0.0
        %228 = vmatprep.mubr.f32.mxu0 0.0
        %229 = vmatmul.mubr.f32.gmra.mrb[0].mxu0 %v155
        %v230 = vpop.f32.mrb[0].mxu0
        %v231 = vadd.f32 0.0, %v230
        %v232 = vpop.f32.mrb[0].mxu0
        %v233 = vadd.f32 0.0, %v232
        %234 = vdwg.mxu0
        %235 = vst [vmem:[%s136] sm:$0xff] %v231
        %236 = vst [vmem:[%s136 + $0x8] sm:$0xff] %v233
        %s237 = sand.u32 %s71, 1
        %s238 = scalar_lea.sflag [#allocation3], %s237
        %s239 = sand.u32 %s71, 1
        %s240 = smul.addr %s239, 16
        %s241 = scalar_lea.vmem [#allocation2], %s240
        // Predicated region
        $region29: #{tpu_custom_call.1} parent=27 // pred_check
          %p242 = pneg %p81
        $region30: #{tpu_custom_call.1} parent=27 // pred_check_branch
          %244 = sbr.rel (%p242) target = $region32
        $region31: #{tpu_custom_call.1} parent=27 // pred_region
          %s246 = ssub.s32 256, 256
          %247 = vsyncadd %s238, %s246
          %s248 = smul.addr %s16, 2
          %s249 = smul.addr %s248, 128
          %s250 = scalar_lea.hbm %s2, %s249
          %s252 = sshll.u32 %s241, 4
          %s253 = int_to_ptr.vmem [resolvable:$true] %s252
          %255 = dma.vmem_to_hbm [thread:$0]  %s253, 256, %s250, %s238
        $region32: #{tpu_custom_call.1} parent=27 // pred_fallthru
          _
      $region28: #{tpu_custom_call.1} parent=5 // pred_fallthru
        _
      %p256 = scmp.le.s32.totalorder 2, %s11
      // Predicated region
      $region33: #{tpu_custom_call.1} parent=5 // pred_check
        %p257 = pneg %p256
      $region34: #{tpu_custom_call.1} parent=5 // pred_check_branch
        %259 = sbr.rel (%p257) target = $region36
      $region35: #{tpu_custom_call.1} parent=5 // pred_region
        %s260 = ssub.s32 %s11, 2
        // Predicated region
        $region37: #{tpu_custom_call.1} parent=35 // pred_check
          %p261 = pneg %p87
        $region38: #{tpu_custom_call.1} parent=35 // pred_check_branch
          %263 = sbr.rel (%p261) target = $region40
        $region39: #{tpu_custom_call.1} parent=35 // pred_region
          %s264 = sand.u32 %s72, 1
          %s265 = scalar_lea.sflag [#allocation3], %s264
          %s266 = sand.u32 %s72, 1
          %s267 = smul.addr %s266, 16
          %s268 = scalar_lea.vmem [#allocation2], %s267
          %269 = dma.done %s265, 256
        $region40: #{tpu_custom_call.1} parent=35 // pred_fallthru
          _
      $region36: #{tpu_custom_call.1} parent=5 // pred_fallthru
        _
    $region6: #{tpu_custom_call.1} parent=1 // loop_footer
      %s15 = sadd.s32 1, %s11
    $region7: #{tpu_custom_call.1} parent=1 // loop_footer_branch
      %10 = sbr.rel target = $region3
    $region8: #{tpu_custom_call.1} parent=1 // loop_exit
      _
    %270 = vsyncpa [#allocation3], 1
    %s271 = scalar_lea.sflag [#allocation3], 1
    %272 = vsyncpa %s271, 1

</llo_original>
